<compile_context>
chip_gen: v7x
topology: tpu7x:2x2x1
jax: 0.10.0
libtpu: 0.0.40
codegen_flags: <defaults>
</compile_context>

<pallas_src>
import functools

import jax
import jax.numpy as jnp
from jax.experimental import pallas as pl
from jax.experimental.pallas import tpu as pltpu


def _posemb_kernel(ids_ref, pos_ref, tok_hbm, out_ref, tok_buf, sem, *,
                   tile_s, batch):
    # ids_ref:  (S*B,)          int32  SMEM (scalar prefetch), row-major over (S, B)
    # pos_ref:  (tile_s, E)     f32    VMEM, positions [i*tile_s, (i+1)*tile_s)
    # tok_hbm:  (V, E)          f32    HBM (pl.ANY), gathered row-by-row via DMA
    # out_ref:  (tile_s, B, E)  f32    VMEM output tile
    # tok_buf:  (tile_s, B, E)         VMEM scratch for gathered token rows
    # sem:      (1,)                   DMA semaphore
    i = pl.program_id(0)
    base = i * tile_s * batch  # flat offset of this tile in the (S*B,) id array

    # Issue all row gathers for this tile (they proceed concurrently).
    # NOTE: out-of-range token ids would be an OOB DMA (caught by the default
    # DMA bounds check), roughly matching PyTorch's index error.
    @pl.loop(0, tile_s)
    def _issue_s(s):
        @pl.loop(0, batch)
        def _issue_b(b):
            tok_id = ids_ref[base + s * batch + b]
            pltpu.make_async_copy(tok_hbm.at[tok_id],
                                  tok_buf.at[s, b],
                                  sem.at[0]).start()

    # Wait for all of them (same-sized descriptors on a shared semaphore:
    # after tile_s*batch waits every gather has landed).
    @pl.loop(0, tile_s)
    def _wait_s(s):
        @pl.loop(0, batch)
        def _wait_b(b):
            pltpu.make_async_copy(tok_hbm.at[0],
                                  tok_buf.at[s, b],
                                  sem.at[0]).wait()

    emb = out_ref.shape[-1]
    scale = jnp.float32(emb) ** 0.5
    tok = tok_buf[...].astype(jnp.float32)               # (tile_s, B, E)
    pos = pos_ref[...].astype(jnp.float32)[:, None, :]   # (tile_s, 1, E) -> bcast over B
    # TODO(synk): training-mode dropout (PRNG masking) not implemented; eval
    # mode dropout is the identity.
    out_ref[...] = (tok * scale + pos).astype(out_ref.dtype)


def _pick_tile_s(S, B, target_rows=256):
    """Largest divisor of S with ~target_rows gathered rows per step,
    sublane-aligned pos blocks, and >=2 grid steps when S allows it."""
    for cand in range(S, 0, -1):
        if S % cand:
            continue
        if cand * B > target_rows:
            continue
        if (cand % 8) and cand != S:          # pos block (cand, E) needs cand%8==0 or cand==S
            continue
        if (S // cand) < 2 and S >= 16:       # keep >=2 steps for megacore sharding
            continue
        return cand
    return S


def position_wise_embedding(inputs, tok_table, pos_table, *, tile_s=None):
    """inputs: (S, B) int ids; tok_table: (V, E); pos_table: (max_len, E)."""
    S, B = inputs.shape
    V, E = tok_table.shape
    assert pos_table.shape[1] == E, "embedding widths must match"
    assert pos_table.shape[0] >= S, "sequence longer than max_len"

    if tile_s is None:
        tile_s = _pick_tile_s(S, B)
    assert S % tile_s == 0, "tile_s must divide seq_len"
    assert tile_s % 8 == 0 or tile_s == S, "pos block must be sublane-aligned"

    ids_flat = inputs.reshape(-1).astype(jnp.int32)   # (S*B,) row-major -> SMEM
    pos_tab = pos_table[:S]                           # only first S positions used

    kernel = functools.partial(_posemb_kernel, tile_s=tile_s, batch=B)

    out = pl.pallas_call(
        kernel,
        out_shape=jax.ShapeDtypeStruct((S, B, E), jnp.float32),
        grid_spec=pltpu.PrefetchScalarGridSpec(
            num_scalar_prefetch=1,            # ids -> SMEM, visible to index_maps
            grid=(S // tile_s,),
            in_specs=[
                # positional rows for this sequence tile (direct slice, no one-hot)
                pl.BlockSpec((tile_s, E), lambda i, ids: (i, 0)),
                # token table stays in HBM; gathered manually via DMA
                pl.BlockSpec(memory_space=pl.ANY),
            ],
            out_specs=pl.BlockSpec((tile_s, B, E), lambda i, ids: (i, 0, 0)),
            scratch_shapes=[
                pltpu.VMEM((tile_s, B, E), tok_table.dtype),
                pltpu.SemaphoreType.DMA((1,)),
            ],
        ),
        compiler_params=pltpu.CompilerParams(
            dimension_semantics=("parallel",),
            vmem_limit_bytes=64 * 1024 * 1024,
        ),
    )(ids_flat, pos_tab, tok_table)

    return out


if __name__ == "__main__":
    # Small, deterministic synthetic setup (E = 128 -> lane-dense output).
    vocab_size = 64
    emb_sz = 128
    max_len = 64
    seq_len = 16
    batch = 2

    key = jax.random.PRNGKey(0)
    k_tok, k_pos, k_ids = jax.random.split(key, 3)

    # nn.Embedding default init: N(0, 1).
    tok_table = jax.random.normal(k_tok, (vocab_size, emb_sz), dtype=jnp.float32)
    pos_table = jax.random.normal(k_pos, (max_len, emb_sz), dtype=jnp.float32)

    inputs = jax.random.randint(k_ids, (seq_len, batch), 0, vocab_size,
                                dtype=jnp.int32)

    out = position_wise_embedding(inputs, tok_table, pos_table)
    out = jax.block_until_ready(out)

    # Pure-JAX reference for correctness.
    ref = (tok_table[inputs] * jnp.sqrt(jnp.float32(emb_sz))
           + pos_table[jnp.arange(seq_len)][:, None, :])
    assert out.shape == (seq_len, batch, emb_sz)
    assert jnp.allclose(out, ref, atol=1e-5, rtol=1e-5), "mismatch vs reference"

    print("KERNEL_OK")
</pallas_src>

<mosaic_0001>
module attributes {stable_mosaic.version = 11 : i64} {
  func.func @_posemb_kernel(%arg0: i32, %arg1: memref<32xi32, #tpu.memory_space<smem>>, %arg2: memref<8x128xf32, #tpu.memory_space<vmem>>, %arg3: memref<64x128xf32, #tpu.memory_space<any>>, %arg4: memref<8x2x128xf32, #tpu.memory_space<vmem>>, %arg5: memref<8x2x128xf32, #tpu.memory_space<vmem>>, %arg6: memref<1x!tpu.dma_semaphore, #tpu.memory_space<semaphore_mem>>) attributes {dimension_semantics = [#tpu.dimension_semantics<parallel>], iteration_bounds = array<i64: 2>, scalar_prefetch = 1 : i64, scratch_operands = 2 : i64, tpu.core_type = #tpu.core_type<tc>, window_params = [{transform_indices = @transform_0, window_bounds = array<i64: 8, 128>}, {}, {transform_indices = @transform_2, window_bounds = array<i64: 8, 2, 128>}]} {
    %c8_i32 = arith.constant 8 : i32
    %0 = arith.muli %arg0, %c8_i32 : i32
    %c2_i32 = arith.constant 2 : i32
    %1 = arith.muli %0, %c2_i32 : i32
    %c0_i32 = arith.constant 0 : i32
    %c8_i32_0 = arith.constant 8 : i32
    %2 = arith.addi %c0_i32, %c8_i32_0 : i32
    %c1_i32 = arith.constant 1 : i32
    scf.for %arg7 = %c0_i32 to %2 step %c1_i32  : i32 {
      %c1_i32_14 = arith.constant 1 : i32
      %13 = arith.muli %arg7, %c1_i32_14 : i32
      %c0_i32_15 = arith.constant 0 : i32
      %14 = arith.addi %c0_i32_15, %13 : i32
      %c0_i32_16 = arith.constant 0 : i32
      %c2_i32_17 = arith.constant 2 : i32
      %15 = arith.addi %c0_i32_16, %c2_i32_17 : i32
      %c1_i32_18 = arith.constant 1 : i32
      scf.for %arg8 = %c0_i32_16 to %15 step %c1_i32_18  : i32 {
        %c1_i32_20 = arith.constant 1 : i32
        %16 = arith.muli %arg8, %c1_i32_20 : i32
        %c0_i32_21 = arith.constant 0 : i32
        %17 = arith.addi %c0_i32_21, %16 : i32
        %c2_i32_22 = arith.constant 2 : i32
        %18 = arith.muli %14, %c2_i32_22 : i32
        %19 = arith.addi %1, %18 : i32
        %20 = arith.addi %19, %17 : i32
        %21 = arith.index_cast %20 : i32 to index
        %22 = memref.load %arg1[%21] : memref<32xi32, #tpu.memory_space<smem>>
        %c0_i32_23 = arith.constant 0 : i32
        %c0_i32_24 = arith.constant 0 : i32
        %23 = tpu.memref_slice %arg3[%22, %c0_i32_24] : memref<64x128xf32, #tpu.memory_space<any>> -> memref<1x128xf32, #tpu.memory_space<any>>
        %24 = tpu.memref_squeeze %23 : memref<1x128xf32, #tpu.memory_space<any>> -> memref<128xf32, #tpu.memory_space<any>>
        %c0_i32_25 = arith.constant 0 : i32
        %25 = tpu.memref_slice %arg5[%14, %17, %c0_i32_25] : memref<8x2x128xf32, #tpu.memory_space<vmem>> -> memref<1x1x128xf32, #tpu.memory_space<vmem>>
        %26 = tpu.memref_squeeze %25 : memref<1x1x128xf32, #tpu.memory_space<vmem>> -> memref<128xf32, #tpu.memory_space<vmem>>
        %27 = tpu.memref_slice %arg6[%c0_i32_23] : memref<1x!tpu.dma_semaphore, #tpu.memory_space<semaphore_mem>> -> memref<1x!tpu.dma_semaphore, #tpu.memory_space<semaphore_mem>>
        %28 = tpu.memref_squeeze %27 : memref<1x!tpu.dma_semaphore, #tpu.memory_space<semaphore_mem>> -> memref<!tpu.dma_semaphore, #tpu.memory_space<semaphore_mem>>
        tpu.enqueue_dma source(%24 : memref<128xf32, #tpu.memory_space<any>>) target(%26 : memref<128xf32, #tpu.memory_space<vmem>>) target_semaphore(%28 : memref<!tpu.dma_semaphore, #tpu.memory_space<semaphore_mem>>)
      }
      %c2_i32_19 = arith.constant 2 : i32
    }
    %c8_i32_1 = arith.constant 8 : i32
    %c0_i32_2 = arith.constant 0 : i32
    %c8_i32_3 = arith.constant 8 : i32
    %3 = arith.addi %c0_i32_2, %c8_i32_3 : i32
    %c1_i32_4 = arith.constant 1 : i32
    scf.for %arg7 = %c0_i32_2 to %3 step %c1_i32_4  : i32 {
      %c1_i32_14 = arith.constant 1 : i32
      %13 = arith.muli %arg7, %c1_i32_14 : i32
      %c0_i32_15 = arith.constant 0 : i32
      %14 = arith.addi %c0_i32_15, %13 : i32
      %c0_i32_16 = arith.constant 0 : i32
      %c2_i32_17 = arith.constant 2 : i32
      %15 = arith.addi %c0_i32_16, %c2_i32_17 : i32
      %c1_i32_18 = arith.constant 1 : i32
      scf.for %arg8 = %c0_i32_16 to %15 step %c1_i32_18  : i32 {
        %c1_i32_20 = arith.constant 1 : i32
        %16 = arith.muli %arg8, %c1_i32_20 : i32
        %c0_i32_21 = arith.constant 0 : i32
        %17 = arith.addi %c0_i32_21, %16 : i32
        %c0_i32_22 = arith.constant 0 : i32
        %c0_i32_23 = arith.constant 0 : i32
        %c0_i32_24 = arith.constant 0 : i32
        %18 = tpu.memref_slice %arg3[%c0_i32_22, %c0_i32_24] : memref<64x128xf32, #tpu.memory_space<any>> -> memref<1x128xf32, #tpu.memory_space<any>>
        %19 = tpu.memref_squeeze %18 : memref<1x128xf32, #tpu.memory_space<any>> -> memref<128xf32, #tpu.memory_space<any>>
        %c0_i32_25 = arith.constant 0 : i32
        %20 = tpu.memref_slice %arg5[%14, %17, %c0_i32_25] : memref<8x2x128xf32, #tpu.memory_space<vmem>> -> memref<1x1x128xf32, #tpu.memory_space<vmem>>
        %21 = tpu.memref_squeeze %20 : memref<1x1x128xf32, #tpu.memory_space<vmem>> -> memref<128xf32, #tpu.memory_space<vmem>>
        %22 = tpu.memref_slice %arg6[%c0_i32_23] : memref<1x!tpu.dma_semaphore, #tpu.memory_space<semaphore_mem>> -> memref<1x!tpu.dma_semaphore, #tpu.memory_space<semaphore_mem>>
        %23 = tpu.memref_squeeze %22 : memref<1x!tpu.dma_semaphore, #tpu.memory_space<semaphore_mem>> -> memref<!tpu.dma_semaphore, #tpu.memory_space<semaphore_mem>>
        tpu.wait_dma2 semaphore(%23 : memref<!tpu.dma_semaphore, #tpu.memory_space<semaphore_mem>>) src(%19 : memref<128xf32, #tpu.memory_space<any>>) dst(%21 : memref<128xf32, #tpu.memory_space<vmem>>)
      }
      %c2_i32_19 = arith.constant 2 : i32
    }
    %c8_i32_5 = arith.constant 8 : i32
    %cst = arith.constant 1.280000e+02 : f32
    %cst_6 = arith.constant 5.000000e-01 : f32
    %4 = math.powf %cst, %cst_6 : f32
    %c0 = arith.constant 0 : index
    %c0_7 = arith.constant 0 : index
    %c0_8 = arith.constant 0 : index
    %5 = vector.load %arg5[%c0, %c0_7, %c0_8] : memref<8x2x128xf32, #tpu.memory_space<vmem>>, vector<8x2x128xf32>
    %c0_9 = arith.constant 0 : index
    %c0_10 = arith.constant 0 : index
    %6 = vector.load %arg2[%c0_9, %c0_10] : memref<8x128xf32, #tpu.memory_space<vmem>>, vector<8x128xf32>
    %7 = vector.shape_cast %6 : vector<8x128xf32> to vector<8x1x128xf32>
    %8 = vector.broadcast %4 : f32 to vector<8x2x128xf32>
    %9 = arith.mulf %5, %8 : vector<8x2x128xf32>
    %10 = vector.broadcast %7 : vector<8x1x128xf32> to vector<8x2x128xf32>
    %11 = arith.addf %9, %10 : vector<8x2x128xf32>
    %c0_11 = arith.constant 0 : index
    %c0_12 = arith.constant 0 : index
    %c0_13 = arith.constant 0 : index
    %12 = vector.load %arg4[%c0_11, %c0_12, %c0_13] : memref<8x2x128xf32, #tpu.memory_space<vmem>>, vector<8x2x128xf32>
    tpu.vector_store %arg4[%c0_11, %c0_12, %c0_13], %11 {strides = array<i32>} : memref<8x2x128xf32, #tpu.memory_space<vmem>>, vector<8x2x128xf32>,
    return
  }
  func.func @transform_0(%arg0: i32, %arg1: memref<32xi32, #tpu.memory_space<smem>>) -> (i32, i32) {
    %c0_i32 = arith.constant 0 : i32
    %c0_i32_0 = arith.constant 0 : i32
    return %arg0, %c0_i32 : i32, i32
  }
  func.func @transform_2(%arg0: i32, %arg1: memref<32xi32, #tpu.memory_space<smem>>) -> (i32, i32, i32) {
    %c0_i32 = arith.constant 0 : i32
    %c0_i32_0 = arith.constant 0 : i32
    %c0_i32_1 = arith.constant 0 : i32
    return %arg0, %c0_i32, %c0_i32_0 : i32, i32, i32
  }
}

</mosaic_0001>

<llo_original>
// kernel: tpu_custom_call.1
$region0: #{tpu_custom_call.1}
  #allocation0 [shape = 'u32[]', space=smem, size = 0x4, offset = 0x4, fixed_abs, tag = 'smem constant byte address 0x4 - core index']
  #allocation1 [shape = 'u32[144,128]{1,0:T(1,128)}', space=vmem, size = 0x12000, scoped, tag = 'internal scratch']
  #allocation2 [shape = 'f32[8,2,128]{2,1,0:T(2,128)}', space=vmem, size = 0x2000, scoped, tag = 'scratch operand']
  #allocation3 [shape = 's32[1]{0}', space=sflag, size = 0x4, scoped, tag = 'scratch operand']
  #allocation4 [shape = 's32[1]{0}', space=sflag, size = 0x4, scoped, tag = 'scoped memory for tpu_custom_call.1']
  #allocation5 [shape = 'u8[512]{0}', space=smem, size = 0x200, scoped, tag = 'prefetched SMEM operand 0']
  #allocation10 [shape = 's32[]', space=sflag, size = 0x4, offset = 0, fixed_abs, tag = 'sflag constant byte address 0x0 - dummy sync flag']
  #allocation11 [shape = 's32[]', space=sflag, size = 0x4, offset = 0, fixed_abs, tag = 'sflag constant byte address 0x0 - dummy sync flag']
  #allocation12 [shape = 'u32[]', space=smem, size = 0x4, offset = 0x44, fixed_abs, tag = 'smem constant byte address 0x44 - assertion arg 0']
  #allocation13 [shape = 'u32[]', space=smem, size = 0x4, offset = 0x48, fixed_abs, tag = 'smem constant byte address 0x48 - assertion arg 1']
  %s0 = inlined_call_operand.hbm [shape: s32[32], index: 0, kind: input, shape index: {}]
  %s1 = inlined_call_operand.hbm [shape: f32[16,128], index: 1, kind: input, shape index: {}]
  %s2 = inlined_call_operand.hbm [shape: f32[64,128], index: 2, kind: input, shape index: {}]
  %s3 = inlined_call_operand.hbm [shape: f32[16,2,128], index: 3, kind: output, shape index: {}]
  %s4 = sld [smem:[#allocation0]]
  $region73: #{tpu_custom_call.1} parent=0
    _
  %s6 = ssub.s32 1, %s4
  %s7 = scalar_select 0, %s6, %s4
  %9 = dma.hbm_to_smem %s0, 16, [#allocation5], [#allocation4]
  %10 = dma.done [#allocation4], 16
  %11 = sfence
  $region1: #{tpu_custom_call.1} parent=0
    #allocation6 [shape = 'u8[8192]{0}', space=vmem, size = 0x2000, scoped, tag = 'input window, operand 1']
    #allocation7 [shape = 's32[2]{0}', space=sflag, size = 0x8, scoped, tag = 'scoped memory for tpu_custom_call.1']
    #allocation8 [shape = 's32[2]{0}', space=sflag, size = 0x8, scoped, tag = 'scoped memory for tpu_custom_call.1']
    #allocation9 [shape = 'u8[16384]{0}', space=vmem, size = 0x4000, scoped, tag = 'output window, operand 0']
    %12 = vsyncpa [#allocation7], 0
    %s13 = scalar_lea.sflag [#allocation7], 1
    %14 = vsyncpa %s13, 0
    %15 = vsyncpa [#allocation8], 0
    %s16 = scalar_lea.sflag [#allocation8], 1
    %17 = vsyncpa %s16, 0
    loop: start=0, step=1, limit=4
    $region2: #{tpu_custom_call.1} parent=1 // loop_pre_header
      _
    $region3: #{tpu_custom_call.1} parent=1 // loop_header
      %s19 = sphi 0, %s23
      %p20 = scmp.ge.s32.totalorder %s19, 4
      %s29 = sphi 0, %s31
      %s32 = sphi 0, %s29
      %s33 = sphi 0, %s32
      %s49 = sphi 0, %s33
      %s55 = sphi 0, %s57
      %s58 = sphi 0, %s55
      %s59 = sphi 0, %s58
      %s75 = sphi 0, %s59
    $region4: #{tpu_custom_call.1} parent=1 // loop_header_branch
      %22 = sbr.rel (%p20) target = $region8
    $region5: #{tpu_custom_call.1} parent=1 // loop_body
      %s24 = ssub.s32 %s19, 1
      %s25 = ssub.s32 %s19, 2
      %s26 = sadd.s32 %s19, 1
      %s27 = ssub.s32 %s19, %s26
      %p28 = scmp.eq.s32.totalorder %s27, 0
      %s30 = sadd.s32 %s29, 1
      %s31 = scalar_select %p28, %s29, %s30
      %p34 = pneg %p28
      %p35 = scmp.eq.s32.totalorder %s19, 1
      %p36 = por %p34, %p35
      %p37 = scmp.ne.s32.totalorder %s29, %s32
      %p38 = scmp.eq.s32.totalorder %s19, 0
      %p39 = por %p37, %p38
      %p40 = scmp.ne.s32.totalorder %s29, %s32
      %p41 = scmp.eq.s32.totalorder %s24, 1
      %p42 = por %p40, %p41
      %p43 = scmp.ne.s32.totalorder %s32, %s33
      %p44 = scmp.eq.s32.totalorder %s24, 0
      %p45 = por %p43, %p44
      %p46 = scmp.ne.s32.totalorder %s32, %s33
      %p47 = scmp.eq.s32.totalorder %s25, 1
      %p48 = por %p46, %p47
      %p50 = scmp.ne.s32.totalorder %s33, %s49
      %p51 = scmp.eq.s32.totalorder %s25, 0
      %p52 = por %p50, %p51
      %s53 = ssub.s32 %s19, %s26
      %p54 = scmp.eq.s32.totalorder %s53, 0
      %s56 = sadd.s32 %s55, 1
      %s57 = scalar_select %p54, %s55, %s56
      %p60 = pneg %p54
      %p61 = scmp.eq.s32.totalorder %s19, 1
      %p62 = por %p60, %p61
      %p63 = scmp.ne.s32.totalorder %s55, %s58
      %p64 = scmp.eq.s32.totalorder %s19, 0
      %p65 = por %p63, %p64
      %p66 = scmp.ne.s32.totalorder %s55, %s58
      %p67 = scmp.eq.s32.totalorder %s24, 1
      %p68 = por %p66, %p67
      %p69 = scmp.ne.s32.totalorder %s58, %s59
      %p70 = scmp.eq.s32.totalorder %s24, 0
      %p71 = por %p69, %p70
      %p72 = scmp.ne.s32.totalorder %s58, %s59
      %p73 = scmp.eq.s32.totalorder %s25, 1
      %p74 = por %p72, %p73
      %p76 = scmp.ne.s32.totalorder %s59, %s75
      %p77 = scmp.eq.s32.totalorder %s25, 0
      %p78 = por %p76, %p77
      %p79 = scmp.le.s32.totalorder 1, %s19
      %p80 = scmp.lt.s32.totalorder %s19, 3
      %p81 = pnand %p79, %p80
      %p82 = pneg %p81
      // Predicated region
      $region9: #{tpu_custom_call.1} parent=5 // pred_check
        _
      $region10: #{tpu_custom_call.1} parent=5 // pred_check_branch
        %84 = sbr.rel (%p81) target = $region12
      $region11: #{tpu_custom_call.1} parent=5 // pred_region
        %s85 = ssub.s32 %s19, 1
      $region12: #{tpu_custom_call.1} parent=5 // pred_fallthru
        _
      %p86 = scmp.lt.s32.totalorder %s19, 2
      // Predicated region
      $region13: #{tpu_custom_call.1} parent=5 // pred_check
        %p87 = pneg %p86
      $region14: #{tpu_custom_call.1} parent=5 // pred_check_branch
        %89 = sbr.rel (%p87) target = $region16
      $region15: #{tpu_custom_call.1} parent=5 // pred_region
        // Predicated region
        $region17: #{tpu_custom_call.1} parent=15 // pred_check
          %p90 = pneg %p39
        $region18: #{tpu_custom_call.1} parent=15 // pred_check_branch
          %92 = sbr.rel (%p90) target = $region20
        $region19: #{tpu_custom_call.1} parent=15 // pred_region
          %s93 = sand.u32 %s29, 1
          %s94 = scalar_lea.sflag [#allocation7], %s93
          %s95 = sand.u32 %s29, 1
          %s96 = smul.addr %s95, 8
          %s97 = scalar_lea.vmem [#allocation6], %s96
          %s99 = ssub.s32 128, 128
          %100 = vsyncadd %s94, %s99
          %s101 = smul.addr %s19, 128
          %s102 = scalar_lea.hbm %s1, %s101
          %s104 = sshll.u32 %s97, 4
          %s105 = int_to_ptr.vmem [resolvable:$true] %s104
          %107 = dma.hbm_to_vmem [thread:$0]  %s102, 128, %s105, %s94
        $region20: #{tpu_custom_call.1} parent=15 // pred_fallthru
          _
      $region16: #{tpu_custom_call.1} parent=5 // pred_fallthru
        _
      %p108 = scmp.le.s32.totalorder 1, %s19
      %p109 = scmp.lt.s32.totalorder %s19, 3
      %p110 = pnand %p108, %p109
      %p111 = pneg %p110
      // Predicated region
      $region21: #{tpu_custom_call.1} parent=5 // pred_check
        _
      $region22: #{tpu_custom_call.1} parent=5 // pred_check_branch
        %113 = sbr.rel (%p110) target = $region24
      $region23: #{tpu_custom_call.1} parent=5 // pred_region
        %s114 = ssub.s32 %s19, 1
        %s115 = sand.u32 %s32, 1
        %s116 = scalar_lea.sflag [#allocation7], %s115
        %s117 = sand.u32 %s32, 1
        %s118 = smul.addr %s117, 8
        %s119 = scalar_lea.vmem [#allocation6], %s118
        // Predicated region
        $region25: #{tpu_custom_call.1} parent=23 // pred_check
          %p120 = pneg %p45
        $region26: #{tpu_custom_call.1} parent=23 // pred_check_branch
          %122 = sbr.rel (%p120) target = $region28
        $region27: #{tpu_custom_call.1} parent=23 // pred_region
          %123 = dma.done %s116, 128
        $region28: #{tpu_custom_call.1} parent=23 // pred_fallthru
          _
        %s124 = sand.u32 %s32, 1
        %s125 = scalar_lea.sflag [#allocation7], %s124
        %s126 = sand.u32 %s32, 1
        %s127 = smul.addr %s126, 8
        %s128 = scalar_lea.vmem [#allocation6], %s127
        %p129 = pneg %p45
        %p130 = pneg %p42
        %p131 = pneg %p71
        %p132 = pneg %p68
        %s133 = sand.u32 %s58, 1
        %s134 = scalar_lea.sflag [#allocation8], %s133
        %s135 = sand.u32 %s58, 1
        %s136 = smul.addr %s135, 16
        %s137 = scalar_lea.vmem [#allocation9], %s136
        %s138 = smul.u32 8, %s24
        %s139 = smul.u32 %s24, 16
        loop: start=0, step=1, limit=8
        $region29: #{tpu_custom_call.1} parent=23 // loop_pre_header
          _
        $region30: #{tpu_custom_call.1} parent=23 // loop_header
          %s141 = sphi 0, %s145
          %p142 = scmp.ge.s32.totalorder %s141, 8
        $region31: #{tpu_custom_call.1} parent=23 // loop_header_branch
          %144 = sbr.rel (%p142) target = $region35
        $region32: #{tpu_custom_call.1} parent=23 // loop_body
          loop: start=0, step=1, limit=2
          $region36: #{tpu_custom_call.1} parent=32 // loop_pre_header
            _
          $region37: #{tpu_custom_call.1} parent=32 // loop_header
            %s147 = sphi 0, %s151
            %p148 = scmp.ge.s32.totalorder %s147, 2
          $region38: #{tpu_custom_call.1} parent=32 // loop_header_branch
            %150 = sbr.rel (%p148) target = $region42
          $region39: #{tpu_custom_call.1} parent=32 // loop_body
            %s152 = smul.u32 %s141, 2
            %s153 = sadd.s32 %s139, %s152
            %s154 = sadd.s32 %s153, %s147
            %s155 = sld [smem:[#allocation5 + %s154]]
            %s156 = smul.addr %s155, 16
            %s157 = scalar_lea.hbm %s2, %s156
            %s158 = sadd.s32 %s147, %s152
            %s159 = scalar_lea.vmem [#allocation2], %s158
            // Predicated region
            $region43: #{tpu_custom_call.1} parent=39 // pred_check
              _
            $region44: #{tpu_custom_call.1} parent=39 // pred_check_branch
              %161 = sbr.rel target = $region46
            $region45: #{tpu_custom_call.1} parent=39 // pred_region
              %162 = sst [smem:[#allocation12]] [#allocation11]
              %163 = sst [smem:[#allocation13]] [#allocation10]
            $region46: #{tpu_custom_call.1} parent=39 // pred_fallthru
              _
            %165 = shalt.err (0)
            %s167 = sshll.u32 %s159, 4
            %s168 = int_to_ptr.vmem [resolvable:$true] %s167
            %170 = dma.hbm_to_vmem [thread:$0]  %s157, 16, %s168, [#allocation3]
          $region40: #{tpu_custom_call.1} parent=32 // loop_footer
            %s151 = sadd.s32 1, %s147
          $region41: #{tpu_custom_call.1} parent=32 // loop_footer_branch
            %146 = sbr.rel target = $region37
          $region42: #{tpu_custom_call.1} parent=32 // loop_exit
            _
        $region33: #{tpu_custom_call.1} parent=23 // loop_footer
          %s145 = sadd.s32 1, %s141
        $region34: #{tpu_custom_call.1} parent=23 // loop_footer_branch
          %140 = sbr.rel target = $region30
        $region35: #{tpu_custom_call.1} parent=23 // loop_exit
          _
        loop: start=0, step=1, limit=8
        $region47: #{tpu_custom_call.1} parent=23 // loop_pre_header
          _
        $region48: #{tpu_custom_call.1} parent=23 // loop_header
          %s172 = sphi 0, %s176
          %p173 = scmp.ge.s32.totalorder %s172, 8
        $region49: #{tpu_custom_call.1} parent=23 // loop_header_branch
          %175 = sbr.rel (%p173) target = $region53
        $region50: #{tpu_custom_call.1} parent=23 // loop_body
          loop: start=0, step=1, limit=2
          $region54: #{tpu_custom_call.1} parent=50 // loop_pre_header
            _
          $region55: #{tpu_custom_call.1} parent=50 // loop_header
            %s178 = sphi 0, %s182
            %p179 = scmp.ge.s32.totalorder %s178, 2
          $region56: #{tpu_custom_call.1} parent=50 // loop_header_branch
            %181 = sbr.rel (%p179) target = $region60
          $region57: #{tpu_custom_call.1} parent=50 // loop_body
            %184 = dma.done [#allocation3], 16
          $region58: #{tpu_custom_call.1} parent=50 // loop_footer
            %s182 = sadd.s32 1, %s178
          $region59: #{tpu_custom_call.1} parent=50 // loop_footer_branch
            %177 = sbr.rel target = $region55
          $region60: #{tpu_custom_call.1} parent=50 // loop_exit
            _
        $region51: #{tpu_custom_call.1} parent=23 // loop_footer
          %s176 = sadd.s32 1, %s172
        $region52: #{tpu_custom_call.1} parent=23 // loop_footer_branch
          %171 = sbr.rel target = $region48
        $region53: #{tpu_custom_call.1} parent=23 // loop_exit
          _
        %v185 = vld [vmem:[#allocation2] sm:$0x3]
        %v186 = vld [vmem:[#allocation2 + $0x2] sm:$0x3]
        %v187 = vld [vmem:[#allocation2 + $0x4] sm:$0x3]
        %v188 = vld [vmem:[#allocation2 + $0x6] sm:$0x3]
        %v189 = vld [vmem:[#allocation2 + $0x8] sm:$0x3]
        %v190 = vld [vmem:[#allocation2 + $0xa] sm:$0x3]
        %v191 = vld [vmem:[#allocation2 + $0xc] sm:$0x3]
        %v192 = vld [vmem:[#allocation2 + $0xe] sm:$0x3]
        %v193 = vld [vmem:[%s119] sm:$0xff]
        %v195 = vcombine.high %v193, %v193
        %v197 = vunpack.c.l.s4 1966171168
        %v198 = vunpack.c.0.s8 %v197
        %v199 = vlaneseq
        %v200 = vshrl.u32 %v199, 7
        %v201 = vsub.s32 %v198, %v200
        %v202 = vrot.slane %v193, %v201
        %v204 = vunpack.c.l.s4 1966171168
        %v205 = vunpack.c.0.s8 %v204
        %v206 = vlaneseq
        %v207 = vshrl.u32 %v206, 7
        %v208 = vsub.s32 %v205, %v207
        %v209 = vrot.slane %v195, %v208
        %v210 = vcombine.high %v202, %v202
        %v211 = vcombine.high %v209, %v209
        %v213 = vunpack.c.l.s4 1966171168
        %v214 = vunpack.c.0.s8 %v213
        %v215 = vlaneseq
        %v216 = vshrl.u32 %v215, 7
        %v217 = vsub.s32 %v214, %v216
        %v218 = vrot.slane %v202, %v217
        %v220 = vunpack.c.l.s4 1966171168
        %v221 = vunpack.c.0.s8 %v220
        %v222 = vlaneseq
        %v223 = vshrl.u32 %v222, 7
        %v224 = vsub.s32 %v221, %v223
        %v225 = vrot.slane %v209, %v224
        %v227 = vunpack.c.l.s4 1966171168
        %v228 = vunpack.c.0.s8 %v227
        %v229 = vlaneseq
        %v230 = vshrl.u32 %v229, 7
        %v231 = vsub.s32 %v228, %v230
        %v232 = vrot.slane %v210, %v231
        %v234 = vunpack.c.l.s4 1966171168
        %v235 = vunpack.c.0.s8 %v234
        %v236 = vlaneseq
        %v237 = vshrl.u32 %v236, 7
        %v238 = vsub.s32 %v235, %v237
        %v239 = vrot.slane %v211, %v238
        %v240 = vcombine.high %v218, %v218
        %v241 = vcombine.high %v225, %v225
        %v242 = vcombine.high %v232, %v232
        %v243 = vcombine.high %v239, %v239
        %v244 = vmul.f32 %v185, 11.313708
        %v245 = vmul.f32 %v186, 11.313708
        %v246 = vmul.f32 %v187, 11.313708
        %v247 = vmul.f32 %v188, 11.313708
        %v248 = vmul.f32 %v189, 11.313708
        %v249 = vmul.f32 %v190, 11.313708
        %v250 = vmul.f32 %v191, 11.313708
        %v251 = vmul.f32 %v192, 11.313708
        %v252 = vlaneseq
        %v253 = vshrl.u32 %v252, 7
        %v254 = vsub.s32 0, %v253
        %v255 = vrot.slane %v218, %v254
        %v256 = vlaneseq
        %v257 = vshrl.u32 %v256, 7
        %v258 = vsub.s32 0, %v257
        %v259 = vrot.slane %v232, %v258
        %v260 = vlaneseq
        %v261 = vshrl.u32 %v260, 7
        %v262 = vsub.s32 0, %v261
        %v263 = vrot.slane %v240, %v262
        %v264 = vlaneseq
        %v265 = vshrl.u32 %v264, 7
        %v266 = vsub.s32 0, %v265
        %v267 = vrot.slane %v242, %v266
        %v268 = vlaneseq
        %v269 = vshrl.u32 %v268, 7
        %v270 = vsub.s32 0, %v269
        %v271 = vrot.slane %v225, %v270
        %v272 = vlaneseq
        %v273 = vshrl.u32 %v272, 7
        %v274 = vsub.s32 0, %v273
        %v275 = vrot.slane %v239, %v274
        %v276 = vlaneseq
        %v277 = vshrl.u32 %v276, 7
        %v278 = vsub.s32 0, %v277
        %v279 = vrot.slane %v241, %v278
        %v280 = vlaneseq
        %v281 = vshrl.u32 %v280, 7
        %v282 = vsub.s32 0, %v281
        %v283 = vrot.slane %v243, %v282
        %v292 = vadd.f32 %v244, %v255
        %v293 = vadd.f32 %v245, %v259
        %v294 = vadd.f32 %v246, %v263
        %v295 = vadd.f32 %v247, %v267
        %v296 = vadd.f32 %v248, %v271
        %v297 = vadd.f32 %v249, %v275
        %v298 = vadd.f32 %v250, %v279
        %v299 = vadd.f32 %v251, %v283
        %300 = vst [vmem:[%s137] sm:$0x3] %v292
        %301 = vst [vmem:[%s137 + $0x2] sm:$0x3] %v293
        %302 = vst [vmem:[%s137 + $0x4] sm:$0x3] %v294
        %303 = vst [vmem:[%s137 + $0x6] sm:$0x3] %v295
        %304 = vst [vmem:[%s137 + $0x8] sm:$0x3] %v296
        %305 = vst [vmem:[%s137 + $0xa] sm:$0x3] %v297
        %306 = vst [vmem:[%s137 + $0xc] sm:$0x3] %v298
        %307 = vst [vmem:[%s137 + $0xe] sm:$0x3] %v299
        %s308 = sand.u32 %s58, 1
        %s309 = scalar_lea.sflag [#allocation8], %s308
        %s310 = sand.u32 %s58, 1
        %s311 = smul.addr %s310, 16
        %s312 = scalar_lea.vmem [#allocation9], %s311
        // Predicated region
        $region61: #{tpu_custom_call.1} parent=23 // pred_check
          %p313 = pneg %p68
        $region62: #{tpu_custom_call.1} parent=23 // pred_check_branch
          %315 = sbr.rel (%p313) target = $region64
        $region63: #{tpu_custom_call.1} parent=23 // pred_region
          %s316 = smul.u32 8, %s24
          %s318 = ssub.s32 256, 256
          %319 = vsyncadd %s309, %s318
          %s320 = smul.addr %s316, 32
          %s321 = scalar_lea.hbm %s3, %s320
          %s322 = sshll.u32 %s312, 4
          %s323 = int_to_ptr.vmem [resolvable:$true] %s322
          %328 = dma.vmem_to_hbm [thread:$0]  %s323, 256, %s321, %s309, 32, 32, 2
        $region64: #{tpu_custom_call.1} parent=23 // pred_fallthru
          _
      $region24: #{tpu_custom_call.1} parent=5 // pred_fallthru
        _
      %p329 = scmp.le.s32.totalorder 2, %s19
      // Predicated region
      $region65: #{tpu_custom_call.1} parent=5 // pred_check
        %p330 = pneg %p329
      $region66: #{tpu_custom_call.1} parent=5 // pred_check_branch
        %332 = sbr.rel (%p330) target = $region68
      $region67: #{tpu_custom_call.1} parent=5 // pred_region
        %s333 = ssub.s32 %s19, 2
        // Predicated region
        $region69: #{tpu_custom_call.1} parent=67 // pred_check
          %p334 = pneg %p74
        $region70: #{tpu_custom_call.1} parent=67 // pred_check_branch
          %336 = sbr.rel (%p334) target = $region72
        $region71: #{tpu_custom_call.1} parent=67 // pred_region
          %s337 = sand.u32 %s59, 1
          %s338 = scalar_lea.sflag [#allocation8], %s337
          %s339 = sand.u32 %s59, 1
          %s340 = smul.addr %s339, 16
          %s341 = scalar_lea.vmem [#allocation9], %s340
          %342 = dma.done %s338, 256
        $region72: #{tpu_custom_call.1} parent=67 // pred_fallthru
          _
      $region68: #{tpu_custom_call.1} parent=5 // pred_fallthru
        _
    $region6: #{tpu_custom_call.1} parent=1 // loop_footer
      %s23 = sadd.s32 1, %s19
    $region7: #{tpu_custom_call.1} parent=1 // loop_footer_branch
      %18 = sbr.rel target = $region3
    $region8: #{tpu_custom_call.1} parent=1 // loop_exit
      _
    %343 = vsyncpa [#allocation7], 1
    %s344 = scalar_lea.sflag [#allocation7], 1
    %345 = vsyncpa %s344, 1
    %346 = vsyncpa [#allocation8], 1
    %s347 = scalar_lea.sflag [#allocation8], 1
    %348 = vsyncpa %s347, 1
  %349 = vsyncmov [#allocation3]
  %s350 = vpop.sfrf %349
  %p351 = scmp.eq.s32.totalorder %s350, 0
  %p352 = pneg %p351
  %354 = shalt.err (%p352)

</llo_original>
